<compile_context>
chip_gen: v6e
topology: v6e:2x2x1
jax: 0.10.0
libtpu: 0.0.40
codegen_flags: <defaults>
</compile_context>

<pallas_src>
import numpy as np
import jax
import jax.numpy as jnp
from jax.experimental import pallas as pl
from jax.experimental.pallas import tpu as pltpu

# ----- Actor hyperparameters (synthetic, deterministic) -----
STATE_DIM = 16
ACTION_DIM = 4
HIDDEN_DIM = 32
LOG_STD_MIN = -10.0
LOG_STD_MAX = 2.0
BATCH = 8

# log_std = LOG_STD_MIN + 0.5*(MAX-MIN)*(tanh(raw)+1)  ==  A*tanh(raw) + C
_LS_A = 0.5 * (LOG_STD_MAX - LOG_STD_MIN)
_LS_C = LOG_STD_MIN + _LS_A

# Row layout of the packed weight slab (all slice starts sublane-aligned).
_W1_R0, _W1_R1 = 0, STATE_DIM                       # rows  0:16 -> w1 (16, 32)
_W2_R0, _W2_R1 = _W1_R1, _W1_R1 + HIDDEN_DIM        # rows 16:48 -> w2 (32, 32)
_W3_R0, _W3_R1 = _W2_R1, _W2_R1 + HIDDEN_DIM        # rows 48:80 -> w3 (32, 32 padded)
_W_ROWS = _W3_R1                                    # 80


def actor_kernel(state_ref, noise_ref, w_ref, b_ref, out_ref):
    x = state_ref[...]                               # (B, 16)
    noise = noise_ref[...]                           # (B, 4)

    # Static slices of the packed weight slab (zero-cost ref views).
    w1 = w_ref[_W1_R0:_W1_R1, :]                     # (16, 32)
    w2 = w_ref[_W2_R0:_W2_R1, :]                     # (32, 32)
    w3 = w_ref[_W3_R0:_W3_R1, :]                     # (32, 32); cols 0:8 real
    b = b_ref[...]                                   # (8, 32); rows 0/1/2 = b1/b2/b3pad

    # fc: Linear -> ReLU -> Linear -> ReLU -> Linear(2*action_dim, merged head)
    h1 = jnp.maximum(
        jnp.dot(x, w1, preferred_element_type=jnp.float32) + b[0:1, :], 0.0)
    h2 = jnp.maximum(
        jnp.dot(h1, w2, preferred_element_type=jnp.float32) + b[1:2, :], 0.0)
    head = jnp.dot(h2, w3, preferred_element_type=jnp.float32) + b[2:3, :]

    # chunk(2, dim=-1): first half -> mu, second half -> raw log_std
    mu = head[:, 0:ACTION_DIM]
    raw_ls = head[:, ACTION_DIM:2 * ACTION_DIM]

    # log_std squashing to [log_std_min, log_std_max] (single FMA)
    log_std = _LS_A * jnp.tanh(raw_ls) + _LS_C

    # compute_pi = True
    std = jnp.exp(log_std)
    pi = mu + noise * std

    # compute_log_pi = True : gaussian_logprob
    residual = jnp.sum(-0.5 * noise * noise - log_std, axis=-1, keepdims=True)
    log_pi = residual - 0.5 * np.log(2.0 * np.pi) * ACTION_DIM

    # squash
    mu_t = jnp.tanh(mu)
    pi_t = jnp.tanh(pi)
    correction = jnp.sum(
        jnp.log(jnp.maximum(1.0 - pi_t * pi_t, 0.0) + 1e-06),
        axis=-1, keepdims=True)
    log_pi = log_pi - correction

    # Fused output slab: [mu(4) | pi(4) | log_std(4) | log_pi bcast(4)]
    log_pi_b = jnp.broadcast_to(log_pi, (mu_t.shape[0], ACTION_DIM))
    out_ref[...] = jnp.concatenate([mu_t, pi_t, log_std, log_pi_b], axis=-1)


def actor_forward(state, packed_params, noise):
    """state: (B, state_dim) f32; noise: (B, action_dim) f32 (~ randn_like(mu))."""
    B = state.shape[0]
    w_slab, b_slab = packed_params
    vmem = pl.BlockSpec(memory_space=pltpu.MemorySpace.VMEM)
    out = pl.pallas_call(
        actor_kernel,
        out_shape=jax.ShapeDtypeStruct((B, 4 * ACTION_DIM), jnp.float32),
        in_specs=[vmem] * 4,
        out_specs=vmem,
    )(state, noise, w_slab, b_slab)
    mu = out[:, 0:ACTION_DIM]
    pi = out[:, ACTION_DIM:2 * ACTION_DIM]
    log_std = out[:, 2 * ACTION_DIM:3 * ACTION_DIM]
    log_pi = out[:, 3 * ACTION_DIM:3 * ACTION_DIM + 1]
    return mu, pi, log_pi, log_std


def init_params(key):
    """Deterministic synthetic weights (PyTorch-style uniform fan-in init),
    pre-packed once into a single weight slab + a single bias slab."""
    ks = jax.random.split(key, 6)

    def lin(kw, kb, fan_in, fan_out):
        bound = 1.0 / np.sqrt(fan_in)
        w = jax.random.uniform(kw, (fan_in, fan_out), jnp.float32, -bound, bound)
        b = jax.random.uniform(kb, (fan_out,), jnp.float32, -bound, bound)
        return w, b

    w1, b1 = lin(ks[0], ks[1], STATE_DIM, HIDDEN_DIM)
    w2, b2 = lin(ks[2], ks[3], HIDDEN_DIM, HIDDEN_DIM)
    w3, b3 = lin(ks[4], ks[5], HIDDEN_DIM, 2 * ACTION_DIM)

    # Weight slab (80, 32): rows [w1 | w2 | w3 zero-padded from 8 -> 32 cols].
    w3_pad = jnp.zeros((HIDDEN_DIM, HIDDEN_DIM), jnp.float32)
    w3_pad = w3_pad.at[:, :2 * ACTION_DIM].set(w3)
    w_slab = jnp.concatenate([w1, w2, w3_pad], axis=0)
    assert w_slab.shape == (_W_ROWS, HIDDEN_DIM)

    # Bias slab (8, 32): row0 = b1, row1 = b2, row2 = b3 (zero-padded), rest 0.
    b_slab = jnp.zeros((8, HIDDEN_DIM), jnp.float32)
    b_slab = b_slab.at[0, :].set(b1)
    b_slab = b_slab.at[1, :].set(b2)
    b_slab = b_slab.at[2, :2 * ACTION_DIM].set(b3)

    return (w_slab, b_slab)


if __name__ == "__main__":
    key = jax.random.PRNGKey(0)
    k_state, k_params, k_noise = jax.random.split(key, 3)

    state = jax.random.normal(k_state, (BATCH, STATE_DIM), jnp.float32)
    params = init_params(k_params)
    # torch.randn_like(mu) equivalent, made deterministic here
    noise = jax.random.normal(k_noise, (BATCH, ACTION_DIM), jnp.float32)

    mu, pi, log_pi, log_std = actor_forward(state, params, noise)
    jax.block_until_ready((mu, pi, log_pi, log_std))

    assert mu.shape == (BATCH, ACTION_DIM)
    assert pi.shape == (BATCH, ACTION_DIM)
    assert log_pi.shape == (BATCH, 1)
    assert log_std.shape == (BATCH, ACTION_DIM)
    assert bool(jnp.all(jnp.isfinite(mu)))
    assert bool(jnp.all(jnp.isfinite(pi)))
    assert bool(jnp.all(jnp.isfinite(log_pi)))
    assert bool(jnp.all(log_std >= LOG_STD_MIN)) and bool(jnp.all(log_std <= LOG_STD_MAX))
    print("KERNEL_OK")
</pallas_src>

<mosaic_0001>
module attributes {stable_mosaic.version = 11 : i64} {
  func.func @actor_kernel(%arg0: memref<8x16xf32, #tpu.memory_space<vmem>>, %arg1: memref<8x4xf32, #tpu.memory_space<vmem>>, %arg2: memref<80x32xf32, #tpu.memory_space<vmem>>, %arg3: memref<8x32xf32, #tpu.memory_space<vmem>>, %arg4: memref<8x16xf32, #tpu.memory_space<vmem>>) attributes {dimension_semantics = [], scalar_prefetch = 0 : i64, scratch_operands = 0 : i64, tpu.core_type = #tpu.core_type<tc>} {
    %c0 = arith.constant 0 : index
    %c0_0 = arith.constant 0 : index
    %0 = vector.load %arg0[%c0, %c0_0] : memref<8x16xf32, #tpu.memory_space<vmem>>, vector<8x16xf32>
    %c0_1 = arith.constant 0 : index
    %c0_2 = arith.constant 0 : index
    %1 = vector.load %arg1[%c0_1, %c0_2] : memref<8x4xf32, #tpu.memory_space<vmem>>, vector<8x4xf32>
    %c0_3 = arith.constant 0 : index
    %c0_4 = arith.constant 0 : index
    %2 = vector.load %arg2[%c0_3, %c0_4] : memref<80x32xf32, #tpu.memory_space<vmem>>, vector<16x32xf32>
    %c16 = arith.constant 16 : index
    %c0_5 = arith.constant 0 : index
    %3 = vector.load %arg2[%c16, %c0_5] : memref<80x32xf32, #tpu.memory_space<vmem>>, vector<32x32xf32>
    %c48 = arith.constant 48 : index
    %c0_6 = arith.constant 0 : index
    %4 = vector.load %arg2[%c48, %c0_6] : memref<80x32xf32, #tpu.memory_space<vmem>>, vector<32x32xf32>
    %c0_7 = arith.constant 0 : index
    %c0_8 = arith.constant 0 : index
    %5 = vector.load %arg3[%c0_7, %c0_8] : memref<8x32xf32, #tpu.memory_space<vmem>>, vector<8x32xf32>
    %cst = arith.constant dense<0.000000e+00> : vector<8x32xf32>
    %6 = tpu.matmul %0, %2, %cst {dimension_numbers = #tpu.dot_dimension_numbers<[1], [0], [0], [1], [0, 0, 1, 1], [], []>} : vector<8x16xf32>, vector<16x32xf32>, vector<8x32xf32> -> vector<8x32xf32>
    %7 = vector.extract_strided_slice %5 {offsets = [0, 0], sizes = [1, 32], strides = [1, 1]} : vector<8x32xf32> to vector<1x32xf32>
    %8 = vector.broadcast %7 : vector<1x32xf32> to vector<8x32xf32>
    %9 = arith.addf %6, %8 : vector<8x32xf32>
    %cst_9 = arith.constant 0.000000e+00 : f32
    %10 = vector.broadcast %cst_9 : f32 to vector<8x32xf32>
    %11 = arith.maximumf %9, %10 : vector<8x32xf32>
    %cst_10 = arith.constant dense<0.000000e+00> : vector<8x32xf32>
    %12 = tpu.matmul %11, %3, %cst_10 {dimension_numbers = #tpu.dot_dimension_numbers<[1], [0], [0], [1], [0, 0, 1, 1], [], []>} : vector<8x32xf32>, vector<32x32xf32>, vector<8x32xf32> -> vector<8x32xf32>
    %13 = vector.extract_strided_slice %5 {offsets = [1, 0], sizes = [1, 32], strides = [1, 1]} : vector<8x32xf32> to vector<1x32xf32>
    %14 = vector.broadcast %13 : vector<1x32xf32> to vector<8x32xf32>
    %15 = arith.addf %12, %14 : vector<8x32xf32>
    %cst_11 = arith.constant 0.000000e+00 : f32
    %16 = vector.broadcast %cst_11 : f32 to vector<8x32xf32>
    %17 = arith.maximumf %15, %16 : vector<8x32xf32>
    %cst_12 = arith.constant dense<0.000000e+00> : vector<8x32xf32>
    %18 = tpu.matmul %17, %4, %cst_12 {dimension_numbers = #tpu.dot_dimension_numbers<[1], [0], [0], [1], [0, 0, 1, 1], [], []>} : vector<8x32xf32>, vector<32x32xf32>, vector<8x32xf32> -> vector<8x32xf32>
    %19 = vector.extract_strided_slice %5 {offsets = [2, 0], sizes = [1, 32], strides = [1, 1]} : vector<8x32xf32> to vector<1x32xf32>
    %20 = vector.broadcast %19 : vector<1x32xf32> to vector<8x32xf32>
    %21 = arith.addf %18, %20 : vector<8x32xf32>
    %22 = vector.extract_strided_slice %21 {offsets = [0, 0], sizes = [8, 4], strides = [1, 1]} : vector<8x32xf32> to vector<8x4xf32>
    %23 = vector.extract_strided_slice %21 {offsets = [0, 4], sizes = [8, 4], strides = [1, 1]} : vector<8x32xf32> to vector<8x4xf32>
    %24 = math.tanh %23 : vector<8x4xf32>
    %cst_13 = arith.constant 6.000000e+00 : f32
    %25 = vector.broadcast %cst_13 : f32 to vector<8x4xf32>
    %26 = arith.mulf %25, %24 : vector<8x4xf32>
    %cst_14 = arith.constant -4.000000e+00 : f32
    %27 = vector.broadcast %cst_14 : f32 to vector<8x4xf32>
    %28 = arith.addf %26, %27 : vector<8x4xf32>
    %29 = math.exp %28 : vector<8x4xf32>
    %30 = arith.mulf %1, %29 : vector<8x4xf32>
    %31 = arith.addf %22, %30 : vector<8x4xf32>
    %cst_15 = arith.constant -5.000000e-01 : f32
    %32 = vector.broadcast %cst_15 : f32 to vector<8x4xf32>
    %33 = arith.mulf %32, %1 : vector<8x4xf32>
    %34 = arith.mulf %33, %1 : vector<8x4xf32>
    %35 = arith.subf %34, %28 : vector<8x4xf32>
    %cst_16 = arith.constant dense<0.000000e+00> : vector<8xf32>
    %36 = vector.multi_reduction <add>, %35, %cst_16 [1] : vector<8x4xf32> to vector<8xf32>
    %37 = vector.shape_cast %36 : vector<8xf32> to vector<8x1xf32>
    %cst_17 = arith.constant 3.67575407 : f32
    %38 = vector.broadcast %cst_17 : f32 to vector<8x1xf32>
    %39 = arith.subf %37, %38 : vector<8x1xf32>
    %40 = math.tanh %22 : vector<8x4xf32>
    %41 = math.tanh %31 : vector<8x4xf32>
    %42 = arith.mulf %41, %41 : vector<8x4xf32>
    %cst_18 = arith.constant 1.000000e+00 : f32
    %43 = vector.broadcast %cst_18 : f32 to vector<8x4xf32>
    %44 = arith.subf %43, %42 : vector<8x4xf32>
    %cst_19 = arith.constant 0.000000e+00 : f32
    %45 = vector.broadcast %cst_19 : f32 to vector<8x4xf32>
    %46 = arith.maximumf %44, %45 : vector<8x4xf32>
    %cst_20 = arith.constant 9.99999997E-7 : f32
    %47 = vector.broadcast %cst_20 : f32 to vector<8x4xf32>
    %48 = arith.addf %46, %47 : vector<8x4xf32>
    %49 = math.log %48 : vector<8x4xf32>
    %cst_21 = arith.constant dense<0.000000e+00> : vector<8xf32>
    %50 = vector.multi_reduction <add>, %49, %cst_21 [1] : vector<8x4xf32> to vector<8xf32>
    %51 = vector.shape_cast %50 : vector<8xf32> to vector<8x1xf32>
    %52 = arith.subf %39, %51 : vector<8x1xf32>
    %53 = vector.shape_cast %52 : vector<8x1xf32> to vector<8x1xf32>
    %54 = vector.broadcast %53 : vector<8x1xf32> to vector<8x4xf32>
    %55 = tpu.concatenate %40, %41, %28, %54 in 1 : vector<8x4xf32>, vector<8x4xf32>, vector<8x4xf32>, vector<8x4xf32> -> vector<8x16xf32>
    %c0_22 = arith.constant 0 : index
    %c0_23 = arith.constant 0 : index
    %56 = vector.load %arg4[%c0_22, %c0_23] : memref<8x16xf32, #tpu.memory_space<vmem>>, vector<8x16xf32>
    tpu.vector_store %arg4[%c0_22, %c0_23], %55 {strides = array<i32>} : memref<8x16xf32, #tpu.memory_space<vmem>>, vector<8x16xf32>,
    return
  }
}

</mosaic_0001>

<llo_original>
// kernel: tpu_custom_call.1
$region0: #{tpu_custom_call.1}
  #allocation0 [shape = 'u32[]', space=smem, size = 0x4, offset = 0x4, fixed_abs, tag = 'smem constant byte address 0x4 - core index']
  #allocation1 [shape = 'u32[144,128]{1,0:T(1,128)}', space=vmem, size = 0x12000, scoped, tag = 'internal scratch']
  %s0 = inlined_call_operand.vmem [shape: f32[8,16], index: 0, kind: input, shape index: {}]
  %s1 = inlined_call_operand.vmem [shape: f32[8,4], index: 1, kind: input, shape index: {}]
  %s2 = inlined_call_operand.vmem [shape: f32[80,32], index: 2, kind: input, shape index: {}]
  %s3 = inlined_call_operand.vmem [shape: f32[8,32], index: 3, kind: input, shape index: {}]
  %s4 = inlined_call_operand.hbm [shape: f32[8,16], index: 4, kind: output, shape index: {}]
  %s5 = sld [smem:[#allocation0]]
  $region26: #{tpu_custom_call.1} parent=0
    _
  %s7 = ssub.s32 1, %s5
  %s8 = scalar_select 0, %s7, %s5
  $region1: #{tpu_custom_call.1} parent=0
    #allocation2 [shape = 'u8[4096]{0}', space=vmem, size = 0x1000, scoped, tag = 'output window, operand 0, single buffered']
    #allocation3 [shape = 's32[1]{0}', space=sflag, size = 0x4, scoped, tag = 'scoped memory for tpu_custom_call.1']
    %9 = vsyncpa [#allocation3], 0
    // Predicated region
    $region2: #{tpu_custom_call.1} parent=1 // pred_check
      _
    $region3: #{tpu_custom_call.1} parent=1 // pred_check_branch
      %11 = sbr.rel (0) target = $region5
    $region4: #{tpu_custom_call.1} parent=1 // pred_region
      _
    $region5: #{tpu_custom_call.1} parent=1 // pred_fallthru
      _
    // Predicated region
    $region6: #{tpu_custom_call.1} parent=1 // pred_check
      _
    $region7: #{tpu_custom_call.1} parent=1 // pred_check_branch
      %13 = sbr.rel (0) target = $region9
    $region8: #{tpu_custom_call.1} parent=1 // pred_region
      _
    $region9: #{tpu_custom_call.1} parent=1 // pred_fallthru
      _
    // Predicated region
    $region10: #{tpu_custom_call.1} parent=1 // pred_check
      _
    $region11: #{tpu_custom_call.1} parent=1 // pred_check_branch
      %15 = sbr.rel (0) target = $region13
    $region12: #{tpu_custom_call.1} parent=1 // pred_region
      _
    $region13: #{tpu_custom_call.1} parent=1 // pred_fallthru
      _
    // Predicated region
    $region14: #{tpu_custom_call.1} parent=1 // pred_check
      _
    $region15: #{tpu_custom_call.1} parent=1 // pred_check_branch
      %17 = sbr.rel (0) target = $region17
    $region16: #{tpu_custom_call.1} parent=1 // pred_region
      _
    $region17: #{tpu_custom_call.1} parent=1 // pred_fallthru
      _
    %v18 = vld [vmem:[%s0] sm:$0xff]
    %v19 = vld [vmem:[%s1] sm:$0xff]
    %v20 = vld [vmem:[%s2] sm:$0xff]
    %v21 = vld [vmem:[%s2 + $0x8] sm:$0xff]
    %v22 = vld [vmem:[%s2 + $0x10] sm:$0xff]
    %v23 = vld [vmem:[%s2 + $0x18] sm:$0xff]
    %v24 = vld [vmem:[%s2 + $0x20] sm:$0xff]
    %v25 = vld [vmem:[%s2 + $0x28] sm:$0xff]
    %v26 = vld [vmem:[%s2 + $0x30] sm:$0xff]
    %v27 = vld [vmem:[%s2 + $0x38] sm:$0xff]
    %v28 = vld [vmem:[%s2 + $0x40] sm:$0xff]
    %v29 = vld [vmem:[%s2 + $0x48] sm:$0xff]
    %v30 = vld [vmem:[%s3] sm:$0xff]
    %v31 = vlaneseq
    %v32 = vshrl.u32 %v31, 7
    %v33 = vsub.s32 0, %v32
    %v34 = vrot.slane %v30, %v33
    %vm35 = vcmask 130048
    %v37 = vsel %vm35, %v18, 0
    %39 = vmatprep.subr.mxu0 0.0
    %40 = vmatpush1.msra.mxu0 0.0
    %41 = vmatprep.subr.mxu0 0.0
    %42 = vmatpush1.msra.mxu0 0.0
    %43 = vmatprep.subr.mxu0 0.0
    %44 = vmatpush1.msra.mxu0 0.0
    %45 = vmatprep.subr.mxu0 0.0
    %46 = vmatpush1.msra.mxu0 0.0
    %47 = vmatprep.subr.mxu0 0.0
    %48 = vmatpush1.msra.mxu0 0.0
    %49 = vmatprep.subr.mxu0 0.0
    %50 = vmatpush1.msra.mxu0 0.0
    %51 = vmatprep.subr.mxu0 0.0
    %52 = vmatpush1.msra.mxu0 0.0
    %53 = vmatprep.subr.mxu0 0.0
    %54 = vmatpush1.msra.mxu0 0.0
    %55 = vmatprep.subr.mxu0 0.0
    %56 = vmatpush1.msra.mxu0 0.0
    %57 = vmatprep.subr.mxu0 0.0
    %58 = vmatpush1.msra.mxu0 0.0
    %59 = vmatprep.subr.mxu0 0.0
    %60 = vmatpush1.msra.mxu0 0.0
    %61 = vmatprep.subr.mxu0 0.0
    %62 = vmatpush1.msra.mxu0 0.0
    %63 = vmatprep.subr.mxu0 0.0
    %64 = vmatpush1.msra.mxu0 0.0
    %65 = vmatprep.subr.mxu0 0.0
    %66 = vmatpush1.msra.mxu0 0.0
    %67 = vmatprep.subr.mxu0 0.0
    %68 = vmatpush1.msra.mxu0 %v21
    %69 = vmatprep.subr.mxu0 0.0
    %70 = vmatpush1.msra.mxu0 %v20
    %71 = vmatprep.subr.mxu0 0.0
    %72 = vmatpush2.msra.mxu0 0.0
    %73 = vmatprep.subr.mxu0 0.0
    %74 = vmatpush2.msra.mxu0 0.0
    %75 = vmatprep.subr.mxu0 0.0
    %76 = vmatpush2.msra.mxu0 0.0
    %77 = vmatprep.subr.mxu0 0.0
    %78 = vmatpush2.msra.mxu0 0.0
    %79 = vmatprep.subr.mxu0 0.0
    %80 = vmatpush2.msra.mxu0 0.0
    %81 = vmatprep.subr.mxu0 0.0
    %82 = vmatpush2.msra.mxu0 0.0
    %83 = vmatprep.subr.mxu0 0.0
    %84 = vmatpush2.msra.mxu0 0.0
    %85 = vmatprep.subr.mxu0 0.0
    %86 = vmatpush2.msra.mxu0 0.0
    %87 = vmatprep.subr.mxu0 0.0
    %88 = vmatpush2.msra.mxu0 0.0
    %89 = vmatprep.subr.mxu0 0.0
    %90 = vmatpush2.msra.mxu0 0.0
    %91 = vmatprep.subr.mxu0 0.0
    %92 = vmatpush2.msra.mxu0 0.0
    %93 = vmatprep.subr.mxu0 0.0
    %94 = vmatpush2.msra.mxu0 0.0
    %95 = vmatprep.subr.mxu0 0.0
    %96 = vmatpush2.msra.mxu0 0.0
    %97 = vmatprep.subr.mxu0 0.0
    %98 = vmatpush2.msra.mxu0 0.0
    %99 = vmatprep.subr.mxu0 0.0
    %100 = vmatpush2.msra.mxu0 0.0
    %101 = vmatprep.subr.mxu0 0.0
    %102 = vmatpush2.msra.mxu0 0.0
    %103 = vmatprep.mubr.f32.mxu0 0.0
    %104 = vmatmul.mubr.f32.gmra.mxu0 %v37
    %v105 = vpop.f32.mrf.mxu0
    %v106 = vadd.f32 %v34, %v105
    %v107 = vpop.f32.mrf.mxu0
    %108 = vdwg.mxu0
    %v109 = vmax.f32 %v106, 0.0
    %v110 = vlaneseq
    %v111 = vshrl.u32 %v110, 7
    %v112 = vsub.s32 1, %v111
    %v113 = vrot.slane %v30, %v112
    %vm114 = vcmask 261120
    %v116 = vsel %vm114, %v109, 0
    %118 = vmatprep.subr.mxu0 0.0
    %119 = vmatpush1.msra.mxu0 0.0
    %120 = vmatprep.subr.mxu0 0.0
    %121 = vmatpush1.msra.mxu0 0.0
    %122 = vmatprep.subr.mxu0 0.0
    %123 = vmatpush1.msra.mxu0 0.0
    %124 = vmatprep.subr.mxu0 0.0
    %125 = vmatpush1.msra.mxu0 0.0
    %126 = vmatprep.subr.mxu0 0.0
    %127 = vmatpush1.msra.mxu0 0.0
    %128 = vmatprep.subr.mxu0 0.0
    %129 = vmatpush1.msra.mxu0 0.0
    %130 = vmatprep.subr.mxu0 0.0
    %131 = vmatpush1.msra.mxu0 0.0
    %132 = vmatprep.subr.mxu0 0.0
    %133 = vmatpush1.msra.mxu0 0.0
    %134 = vmatprep.subr.mxu0 0.0
    %135 = vmatpush1.msra.mxu0 0.0
    %136 = vmatprep.subr.mxu0 0.0
    %137 = vmatpush1.msra.mxu0 0.0
    %138 = vmatprep.subr.mxu0 0.0
    %139 = vmatpush1.msra.mxu0 0.0
    %140 = vmatprep.subr.mxu0 0.0
    %141 = vmatpush1.msra.mxu0 0.0
    %142 = vmatprep.subr.mxu0 0.0
    %143 = vmatpush1.msra.mxu0 %v25
    %144 = vmatprep.subr.mxu0 0.0
    %145 = vmatpush1.msra.mxu0 %v24
    %146 = vmatprep.subr.mxu0 0.0
    %147 = vmatpush1.msra.mxu0 %v23
    %148 = vmatprep.subr.mxu0 0.0
    %149 = vmatpush1.msra.mxu0 %v22
    %150 = vmatprep.subr.mxu0 0.0
    %151 = vmatpush2.msra.mxu0 0.0
    %152 = vmatprep.subr.mxu0 0.0
    %153 = vmatpush2.msra.mxu0 0.0
    %154 = vmatprep.subr.mxu0 0.0
    %155 = vmatpush2.msra.mxu0 0.0
    %156 = vmatprep.subr.mxu0 0.0
    %157 = vmatpush2.msra.mxu0 0.0
    %158 = vmatprep.subr.mxu0 0.0
    %159 = vmatpush2.msra.mxu0 0.0
    %160 = vmatprep.subr.mxu0 0.0
    %161 = vmatpush2.msra.mxu0 0.0
    %162 = vmatprep.subr.mxu0 0.0
    %163 = vmatpush2.msra.mxu0 0.0
    %164 = vmatprep.subr.mxu0 0.0
    %165 = vmatpush2.msra.mxu0 0.0
    %166 = vmatprep.subr.mxu0 0.0
    %167 = vmatpush2.msra.mxu0 0.0
    %168 = vmatprep.subr.mxu0 0.0
    %169 = vmatpush2.msra.mxu0 0.0
    %170 = vmatprep.subr.mxu0 0.0
    %171 = vmatpush2.msra.mxu0 0.0
    %172 = vmatprep.subr.mxu0 0.0
    %173 = vmatpush2.msra.mxu0 0.0
    %174 = vmatprep.subr.mxu0 0.0
    %175 = vmatpush2.msra.mxu0 0.0
    %176 = vmatprep.subr.mxu0 0.0
    %177 = vmatpush2.msra.mxu0 0.0
    %178 = vmatprep.subr.mxu0 0.0
    %179 = vmatpush2.msra.mxu0 0.0
    %180 = vmatprep.subr.mxu0 0.0
    %181 = vmatpush2.msra.mxu0 0.0
    %182 = vmatprep.mubr.f32.mxu0 0.0
    %183 = vmatmul.mubr.f32.gmra.mxu0 %v116
    %v184 = vpop.f32.mrf.mxu0
    %v185 = vadd.f32 %v113, %v184
    %v186 = vpop.f32.mrf.mxu0
    %187 = vdwg.mxu0
    %v188 = vmax.f32 %v185, 0.0
    %v189 = vlaneseq
    %v190 = vshrl.u32 %v189, 7
    %v191 = vsub.s32 2, %v190
    %v192 = vrot.slane %v30, %v191
    %v194 = vsel %vm114, %v188, 0
    %196 = vmatprep.subr.mxu0 0.0
    %197 = vmatpush1.msra.mxu0 0.0
    %198 = vmatprep.subr.mxu0 0.0
    %199 = vmatpush1.msra.mxu0 0.0
    %200 = vmatprep.subr.mxu0 0.0
    %201 = vmatpush1.msra.mxu0 0.0
    %202 = vmatprep.subr.mxu0 0.0
    %203 = vmatpush1.msra.mxu0 0.0
    %204 = vmatprep.subr.mxu0 0.0
    %205 = vmatpush1.msra.mxu0 0.0
    %206 = vmatprep.subr.mxu0 0.0
    %207 = vmatpush1.msra.mxu0 0.0
    %208 = vmatprep.subr.mxu0 0.0
    %209 = vmatpush1.msra.mxu0 0.0
    %210 = vmatprep.subr.mxu0 0.0
    %211 = vmatpush1.msra.mxu0 0.0
    %212 = vmatprep.subr.mxu0 0.0
    %213 = vmatpush1.msra.mxu0 0.0
    %214 = vmatprep.subr.mxu0 0.0
    %215 = vmatpush1.msra.mxu0 0.0
    %216 = vmatprep.subr.mxu0 0.0
    %217 = vmatpush1.msra.mxu0 0.0
    %218 = vmatprep.subr.mxu0 0.0
    %219 = vmatpush1.msra.mxu0 0.0
    %220 = vmatprep.subr.mxu0 0.0
    %221 = vmatpush1.msra.mxu0 %v29
    %222 = vmatprep.subr.mxu0 0.0
    %223 = vmatpush1.msra.mxu0 %v28
    %224 = vmatprep.subr.mxu0 0.0
    %225 = vmatpush1.msra.mxu0 %v27
    %226 = vmatprep.subr.mxu0 0.0
    %227 = vmatpush1.msra.mxu0 %v26
    %228 = vmatprep.subr.mxu0 0.0
    %229 = vmatpush2.msra.mxu0 0.0
    %230 = vmatprep.subr.mxu0 0.0
    %231 = vmatpush2.msra.mxu0 0.0
    %232 = vmatprep.subr.mxu0 0.0
    %233 = vmatpush2.msra.mxu0 0.0
    %234 = vmatprep.subr.mxu0 0.0
    %235 = vmatpush2.msra.mxu0 0.0
    %236 = vmatprep.subr.mxu0 0.0
    %237 = vmatpush2.msra.mxu0 0.0
    %238 = vmatprep.subr.mxu0 0.0
    %239 = vmatpush2.msra.mxu0 0.0
    %240 = vmatprep.subr.mxu0 0.0
    %241 = vmatpush2.msra.mxu0 0.0
    %242 = vmatprep.subr.mxu0 0.0
    %243 = vmatpush2.msra.mxu0 0.0
    %244 = vmatprep.subr.mxu0 0.0
    %245 = vmatpush2.msra.mxu0 0.0
    %246 = vmatprep.subr.mxu0 0.0
    %247 = vmatpush2.msra.mxu0 0.0
    %248 = vmatprep.subr.mxu0 0.0
    %249 = vmatpush2.msra.mxu0 0.0
    %250 = vmatprep.subr.mxu0 0.0
    %251 = vmatpush2.msra.mxu0 0.0
    %252 = vmatprep.subr.mxu0 0.0
    %253 = vmatpush2.msra.mxu0 0.0
    %254 = vmatprep.subr.mxu0 0.0
    %255 = vmatpush2.msra.mxu0 0.0
    %256 = vmatprep.subr.mxu0 0.0
    %257 = vmatpush2.msra.mxu0 0.0
    %258 = vmatprep.subr.mxu0 0.0
    %259 = vmatpush2.msra.mxu0 0.0
    %260 = vmatprep.mubr.f32.mxu0 0.0
    %261 = vmatmul.mubr.f32.gmra.mxu0 %v194
    %v262 = vpop.f32.mrf.mxu0
    %v263 = vadd.f32 %v192, %v262
    %v264 = vpop.f32.mrf.mxu0
    %265 = vdwg.mxu0
    %v266 = vtanh.pop %v263
    %v267 = vmul.f32 %v266, 6.0
    %v268 = vadd.f32 %v267, -4.0
    %v269 = vmul.f32 %v268, 1.442695
    %v270 = vpow.pop %v269
    %272 = vrot.lane.b32.xlu0 %v270, 124
    %v273 = vpop.permute.xlu0 %272
    %v275 = vmul.f32 %v19, %v273
    %v276 = vadd.f32 %v263, %v275
    %v277 = vmul.f32 %v19, -0.5
    %v278 = vmul.f32 %v277, %v19
    %280 = vrot.lane.b32.xlu0 %v268, 124
    %v281 = vpop.permute.xlu0 %280
    %v283 = vsub.f32 %v278, %v281
    %vm284 = vcmask 31744
    %v285 = vsel %vm284, %v283, 0.0
    %286 = vadd.xlane.f32.xlu0 %v285
    %v287 = vpop.xlane.xlu0 %286
    %v288 = vsub.f32 %v287, 3.675754
    %v289 = vtanh.pop %v276
    %v290 = vmul.f32 %v289, %v289
    %v291 = vsub.f32 1.0, %v290
    %v292 = vmax.f32 %v291, 0.0
    %v293 = vadd.f32 %v292, 1e-06
    %v294 = vlog2.pop %v293
    %v295 = vmul.f32 %v294, 0.6931472
    %v296 = vsel %vm284, %v295, 0.0
    %297 = vadd.xlane.f32.xlu0 %v296
    %v298 = vpop.xlane.xlu0 %297
    %v299 = vsub.f32 %v288, %v298
    %301 = vrot.lane.b32.xlu0 %v289, 4
    %v302 = vpop.permute.xlu0 %301
    %304 = vrot.lane.b32.xlu0 %v268, 4
    %v305 = vpop.permute.xlu0 %304
    %v307 = vsel %vm284, %v266, %v302
    %vm308 = vcmask 64512
    %v309 = vsel %vm308, %v307, %v305
    %vm310 = vcmask 97280
    %v311 = vsel %vm310, %v309, %v299
    %312 = vst.msk [vmem:[#allocation2] sm:$0xff] %vm35, %v311
    // Predicated region
    $region18: #{tpu_custom_call.1} parent=1 // pred_check
      _
    $region19: #{tpu_custom_call.1} parent=1 // pred_check_branch
      %314 = sbr.rel (0) target = $region21
    $region20: #{tpu_custom_call.1} parent=1 // pred_region
      %s316 = ssub.s32 128, 128
      %317 = vsyncadd [#allocation3], %s316
      %s319 = sshll.u32 [#allocation2], 4
      %s320 = int_to_ptr.vmem [resolvable:$true] %s319
      %322 = dma.vmem_to_hbm [thread:$0]  %s320, 128, %s4, [#allocation3]
    $region21: #{tpu_custom_call.1} parent=1 // pred_fallthru
      _
    // Predicated region
    $region22: #{tpu_custom_call.1} parent=1 // pred_check
      _
    $region23: #{tpu_custom_call.1} parent=1 // pred_check_branch
      %324 = sbr.rel (0) target = $region25
    $region24: #{tpu_custom_call.1} parent=1 // pred_region
      %325 = dma.done [#allocation3], 128
    $region25: #{tpu_custom_call.1} parent=1 // pred_fallthru
      _
    %326 = vsyncpa [#allocation3], 1

</llo_original>
